<compile_context>
chip_gen: v7x
topology: tpu7x:2x2x1
jax: 0.10.0
libtpu: 0.0.40
codegen_flags: <defaults>
</compile_context>

<pallas_src>
import functools
import math

import jax
import jax.numpy as jnp
from jax.experimental import pallas as pl
from jax.experimental.pallas import tpu as pltpu


def _pos_enc_kernel(col_ref, sin_ref, cos_ref, *, fold, block_rows):
    """Writes one (block_rows, fold*half_d) tile of the folded sin/cos planes.

    Folded layout: element (r, c) of a plane corresponds to
        position   p = r*fold + c // half_d
        pair index i = c %  half_d   (frequency 1/10000**(2i/d_model))
    so a row-major reshape to (rows*fold, half_d) recovers the unfolded planes.
    """
    tr, w = sin_ref.shape

    # Column-only terms, precomputed in the wrapper (resident across steps).
    inv_freq = col_ref[0:1, :]          # (1, W): 1 / 10000**(2i/d_model)
    col_term = col_ref[1:2, :]          # (1, W): (c // half_d) * inv_freq

    # Per-row base position, shape (TR, 1).
    row0 = pl.program_id(0) * block_rows
    row = jax.lax.broadcasted_iota(jnp.int32, (tr, 1), 0) + row0
    base_pos = (row * fold).astype(jnp.float32)

    # angle[p, i] = p * inv_freq_i, split into base + intra-fold offset.
    angle = base_pos * inv_freq + col_term          # broadcast -> (TR, W)

    # Exact sin and cos on the half-width planes: same transcendental volume
    # as one full-width sin, no phase-shift precision loss.
    sin_ref[...] = jnp.sin(angle)
    cos_ref[...] = jnp.cos(angle)


@functools.lru_cache(maxsize=None)
def _encoding_table(seq_len, d_model):
    """Builds the (seq_len, d_model) sinusoidal table once and caches it."""
    assert d_model % 2 == 0, "d_model must be even (as in the PyTorch module)"
    half_d = d_model // 2

    # Lane-dense folding: pack `fold` consecutive positions along the lane
    # axis so the kernel output width is a multiple of 128 (unmasked stores).
    fold = 128 // math.gcd(half_d, 128)
    w = fold * half_d                       # always a multiple of 128

    # Folded rows needed to cover seq_len (padded; excess sliced off below).
    folded_rows = pl.cdiv(seq_len, fold)

    # Block sizing:
    #  * per-output block <= ~3 MiB -> 2 outputs x 2 buffers <= ~12 MiB, which
    #    fits every generation's scoped-VMEM default (16 MiB v5e, 32 MiB
    #    v6e/v7x) without raising vmem_limit_bytes.
    #  * at least 2 (prefer 4) grid steps so the "parallel" row axis can be
    #    sharded across v7x's two TensorCores.
    #  * block_rows divides the padded row count -> no clamped last block.
    row_bytes = w * 4
    budget_rows = max(8, ((3 * 1024 * 1024) // row_bytes) // 8 * 8)
    if folded_rows <= 8:
        block_rows = folded_rows
    else:
        target_steps = 4 if folded_rows >= 32 else 2
        cap = max(8, (folded_rows // target_steps) // 8 * 8)
        block_rows = min(budget_rows, cap)
    num_blocks = pl.cdiv(folded_rows, block_rows)
    grid_rows = num_blocks * block_rows     # padded row count

    # Column-only constants, hoisted out of the grid loop (O(W), computed once
    # with the same power() path as the reference).
    c = jnp.arange(w, dtype=jnp.int32)
    two_i = (2 * (c % half_d)).astype(jnp.float32)
    sub_pos = (c // half_d).astype(jnp.float32)
    inv_freq = 1.0 / jnp.power(jnp.float32(10000.0),
                               two_i / jnp.float32(d_model))
    col_consts = jnp.stack([inv_freq, sub_pos * inv_freq], axis=0)  # (2, W)

    total = grid_rows * w                   # elements per output plane
    cost = pl.CostEstimate(flops=int(4 * total),
                           transcendentals=int(2 * total),
                           bytes_accessed=int(8 * total + 8 * w))

    kernel = functools.partial(_pos_enc_kernel, fold=fold,
                               block_rows=block_rows)
    sin_t, cos_t = pl.pallas_call(
        kernel,
        out_shape=(jax.ShapeDtypeStruct((grid_rows, w), jnp.float32),
                   jax.ShapeDtypeStruct((grid_rows, w), jnp.float32)),
        grid=(num_blocks,),
        in_specs=[pl.BlockSpec((2, w), lambda i: (0, 0))],
        out_specs=(pl.BlockSpec((block_rows, w), lambda i: (i, 0)),
                   pl.BlockSpec((block_rows, w), lambda i: (i, 0))),
        compiler_params=pltpu.CompilerParams(
            dimension_semantics=("parallel",)),   # rows independent (v7x 2 TCs)
        cost_estimate=cost,
    )(col_consts)

    # Unfold rows, drop the padding, and interleave sin/cos into the PyTorch
    # layout enc[:, 0::2]=sin, enc[:, 1::2]=cos (one-time XLA layout plumbing).
    sin_t = sin_t.reshape(grid_rows * fold, half_d)[:seq_len]
    cos_t = cos_t.reshape(grid_rows * fold, half_d)[:seq_len]
    return jnp.stack([sin_t, cos_t], axis=-1).reshape(seq_len, d_model)


def positional_encoding(x, d_model, max_len):
    """Equivalent of PositionalEncoding(d_model, max_len, dev)(x).

    x: array of shape (batch, seq_len); only its static shape matters.
    Returns float32 array of shape (seq_len, d_model).
    """
    batch_size, seq_len = x.shape
    assert seq_len <= max_len, "seq_len must not exceed max_len"
    return _encoding_table(int(seq_len), int(d_model))


def _reference(seq_len, d_model):
    """Pure-JAX reference reproducing the PyTorch table construction."""
    pos = jnp.arange(seq_len, dtype=jnp.float32)[:, None]
    _2i = jnp.arange(0, d_model, 2, dtype=jnp.float32)
    enc = jnp.zeros((seq_len, d_model), jnp.float32)
    arg = pos / jnp.power(10000.0, _2i / d_model)
    enc = enc.at[:, 0::2].set(jnp.sin(arg))
    enc = enc.at[:, 1::2].set(jnp.cos(arg))
    return enc


if __name__ == "__main__":
    key = jax.random.PRNGKey(0)

    # 1) Small shape matching the module's forward (values of x irrelevant).
    d_model, max_len, batch, seq_len = 32, 64, 2, 8
    x = jax.random.randint(key, (batch, seq_len), 0, 100, dtype=jnp.int32)
    out = jax.block_until_ready(positional_encoding(x, d_model, max_len))
    ref = _reference(seq_len, d_model)
    assert out.shape == (seq_len, d_model) and out.dtype == jnp.float32
    assert jnp.allclose(out, ref, atol=1e-5, rtol=0.0)

    # 2) Awkward shapes: exercises folding (fold=16) plus row padding + slice.
    d2, s2 = 48, 37
    x2 = jax.random.randint(key, (batch, s2), 0, 100, dtype=jnp.int32)
    out2 = jax.block_until_ready(positional_encoding(x2, d2, 64))
    ref2 = _reference(s2, d2)
    assert out2.shape == (s2, d2)
    assert jnp.allclose(out2, ref2, atol=1e-4, rtol=0.0)

    # 3) Large shape: lane-dense fold=1 path, 4 row tiles, pipelined writeback.
    #    sin/cos are now exact (no phase trick); remaining difference vs the
    #    f32 reference is only f32 angle-rounding path differences at large
    #    positions (~few e-4), far below the previous 5e-3 slack.
    d3, s3 = 512, 2048
    x3 = jax.random.randint(key, (batch, s3), 0, 100, dtype=jnp.int32)
    out3 = jax.block_until_ready(positional_encoding(x3, d3, s3))
    ref3 = _reference(s3, d3)
    assert out3.shape == (s3, d3)
    assert jnp.allclose(out3, ref3, atol=2e-3, rtol=0.0)

    print("KERNEL_OK")
</pallas_src>

<mosaic_0001>
module attributes {stable_mosaic.version = 11 : i64} {
  func.func @_pos_enc_kernel(%arg0: i32, %arg1: memref<2x128xf32, #tpu.memory_space<vmem>>, %arg2: memref<1x128xf32, #tpu.memory_space<vmem>>, %arg3: memref<1x128xf32, #tpu.memory_space<vmem>>) attributes {dimension_semantics = [#tpu.dimension_semantics<parallel>], iteration_bounds = array<i64: 1>, scalar_prefetch = 0 : i64, scratch_operands = 0 : i64, tpu.core_type = #tpu.core_type<tc>, window_params = [{pipeline_mode = #tpu.pipeline_mode<synchronous>, transform_indices = @transform_0, window_bounds = array<i64: 2, 128>}, {transform_indices = @transform_1, window_bounds = array<i64: 1, 128>}, {transform_indices = @transform_2, window_bounds = array<i64: 1, 128>}]} {
    %c0 = arith.constant 0 : index
    %c0_0 = arith.constant 0 : index
    %0 = vector.load %arg1[%c0, %c0_0] : memref<2x128xf32, #tpu.memory_space<vmem>>, vector<1x128xf32>
    %c1 = arith.constant 1 : index
    %c0_1 = arith.constant 0 : index
    %1 = vector.load %arg1[%c1, %c0_1] : memref<2x128xf32, #tpu.memory_space<vmem>>, vector<1x128xf32>
    %c1_i32 = arith.constant 1 : i32
    %2 = arith.muli %arg0, %c1_i32 : i32
    %3 = tpu.iota {dimensions = array<i32: 0>} : vector<1x1xi32>
    %4 = vector.broadcast %2 : i32 to vector<1x1xi32>
    %5 = arith.addi %3, %4 : vector<1x1xi32>
    %c8_i32 = arith.constant 8 : i32
    %6 = vector.broadcast %c8_i32 : i32 to vector<1x1xi32>
    %7 = arith.muli %5, %6 : vector<1x1xi32>
    %8 = arith.sitofp %7 : vector<1x1xi32> to vector<1x1xf32>
    %9 = vector.broadcast %8 : vector<1x1xf32> to vector<1x128xf32>
    %10 = arith.mulf %9, %0 : vector<1x128xf32>
    %11 = arith.addf %10, %1 : vector<1x128xf32>
    %12 = math.sin %11 : vector<1x128xf32>
    %c0_2 = arith.constant 0 : index
    %c0_3 = arith.constant 0 : index
    %13 = vector.load %arg2[%c0_2, %c0_3] : memref<1x128xf32, #tpu.memory_space<vmem>>, vector<1x128xf32>
    tpu.vector_store %arg2[%c0_2, %c0_3], %12 {strides = array<i32>} : memref<1x128xf32, #tpu.memory_space<vmem>>, vector<1x128xf32>,
    %14 = math.cos %11 : vector<1x128xf32>
    %c0_4 = arith.constant 0 : index
    %c0_5 = arith.constant 0 : index
    %15 = vector.load %arg3[%c0_4, %c0_5] : memref<1x128xf32, #tpu.memory_space<vmem>>, vector<1x128xf32>
    tpu.vector_store %arg3[%c0_4, %c0_5], %14 {strides = array<i32>} : memref<1x128xf32, #tpu.memory_space<vmem>>, vector<1x128xf32>,
    return
  }
  func.func @transform_0(%arg0: i32) -> (i32, i32) {
    %c0_i32 = arith.constant 0 : i32
    %c0_i32_0 = arith.constant 0 : i32
    %c0_i32_1 = arith.constant 0 : i32
    return %c0_i32, %c0_i32_0 : i32, i32
  }
  func.func @transform_1(%arg0: i32) -> (i32, i32) {
    %c0_i32 = arith.constant 0 : i32
    %c0_i32_0 = arith.constant 0 : i32
    return %arg0, %c0_i32 : i32, i32
  }
  func.func @transform_2(%arg0: i32) -> (i32, i32) {
    %c0_i32 = arith.constant 0 : i32
    %c0_i32_0 = arith.constant 0 : i32
    return %arg0, %c0_i32 : i32, i32
  }
}

</mosaic_0001>

<llo_original>
// kernel: tpu_custom_call.1
$region0: #{tpu_custom_call.1}
  #allocation0 [shape = 'u32[]', space=smem, size = 0x4, offset = 0x4, fixed_abs, tag = 'smem constant byte address 0x4 - core index']
  #allocation1 [shape = 'u32[144,128]{1,0:T(1,128)}', space=vmem, size = 0x12000, scoped, tag = 'internal scratch']
  %s0 = inlined_call_operand.hbm [shape: f32[2,128], index: 0, kind: input, shape index: {}]
  %s1 = inlined_call_operand.hbm [shape: f32[1,128], index: 1, kind: output, shape index: {0}]
  %s2 = inlined_call_operand.hbm [shape: f32[1,128], index: 2, kind: output, shape index: {1}]
  %3 = xla_tuple %s1, %s2
  %s4 = sld [smem:[#allocation0]]
  $region26: #{tpu_custom_call.1} parent=0
    _
  %s6 = ssub.s32 1, %s4
  %s7 = scalar_select 0, %s6, %s4
  $region1: #{tpu_custom_call.1} parent=0
    #allocation2 [shape = 'u8[1024]{0}', space=vmem, size = 0x400, scoped, tag = 'input window, operand 0, single buffered']
    #allocation3 [shape = 's32[1]{0}', space=sflag, size = 0x4, scoped, tag = 'scoped memory for tpu_custom_call.1']
    #allocation4 [shape = 's32[1]{0}', space=sflag, size = 0x4, scoped, tag = 'scoped memory for tpu_custom_call.1']
    #allocation5 [shape = 'u8[512]{0}', space=vmem, size = 0x400, scoped, tag = 'output window, operand 0, single buffered']
    #allocation6 [shape = 'u8[512]{0}', space=vmem, size = 0x400, scoped, tag = 'output window, operand 1, single buffered']
    #allocation7 [shape = 's32[1]{0}', space=sflag, size = 0x4, scoped, tag = 'scoped memory for tpu_custom_call.1']
    %8 = vsyncpa [#allocation3], 0
    %9 = vsyncpa [#allocation4], 0
    %10 = vsyncpa [#allocation7], 0
    // Predicated region
    $region2: #{tpu_custom_call.1} parent=1 // pred_check
      _
    $region3: #{tpu_custom_call.1} parent=1 // pred_check_branch
      %12 = sbr.rel (0) target = $region5
    $region4: #{tpu_custom_call.1} parent=1 // pred_region
      %s14 = ssub.s32 32, 32
      %15 = vsyncadd [#allocation3], %s14
      %s17 = sshll.u32 [#allocation2], 4
      %s18 = int_to_ptr.vmem [resolvable:$true] %s17
      %20 = dma.hbm_to_vmem [thread:$0]  %s0, 32, %s18, [#allocation3]
    $region5: #{tpu_custom_call.1} parent=1 // pred_fallthru
      _
    // Predicated region
    $region6: #{tpu_custom_call.1} parent=1 // pred_check
      _
    $region7: #{tpu_custom_call.1} parent=1 // pred_check_branch
      %22 = sbr.rel (0) target = $region9
    $region8: #{tpu_custom_call.1} parent=1 // pred_region
      %23 = dma.done [#allocation3], 32
    $region9: #{tpu_custom_call.1} parent=1 // pred_fallthru
      _
    %v24 = vld [vmem:[#allocation2] sm:$0x1]
    %v25 = vld [vmem:[#allocation2 + $0x1] sm:$0x1]
    %v26 = vlaneseq
    %v27 = vshrl.u32 %v26, 7
    %v28 = vstv 0
    %v29 = vadd.s32 %v27, %v28
    %v30 = vmul.u32 %v29, 8
    %v31 = vcvt.s32.f32 %v30
    %v32 = vmul.f32 %v31, %v24
    %v33 = vadd.f32 %v32, %v25
    %v34 = vand.u32 2147483647, %v33
    %vm35 = vcmp.le.f32.partialorder %v34, 0.7853982
    %vm36 = vcmp.lt.s32.totalorder %v33, 0
    %v37 = vand.u32 %v33, 2139095040
    %v38 = vshrl.u32 %v37, 23
    %v39 = vsub.s32 %v38, 127
    %v40 = vand.u32 2147483647, %v33
    %v41 = vand.u32 %v40, 8388607
    %v42 = vor.u32 %v41, 8388608
    %v43 = vsub.s32 0, %v42
    %v44 = vadd.s32 %v39, 1
    %vm45 = vcmp.gt.s32.totalorder %v44, 0
    %v46 = vsel %vm45, %v44, 0
    %v47 = vshrl.u32 %v46, 5
    %v48 = vand.u32 %v46, 31
    %v49 = vsub.s32 32, %v48
    %v50 = vshrl.u32 683565275, %v49
    %v51 = vshll.u32 683565275, %v48
    %v52 = vshrl.u32 2475754826, %v49
    %v53 = vor.u32 %v51, %v52
    %v54 = vshll.u32 2475754826, %v48
    %v55 = vshrl.u32 2131351028, %v49
    %v56 = vor.u32 %v54, %v55
    %v57 = vshll.u32 2131351028, %v48
    %v58 = vshrl.u32 2102212464, %v49
    %v59 = vor.u32 %v57, %v58
    %v60 = vshll.u32 2102212464, %v48
    %v61 = vshrl.u32 920167782, %v49
    %v62 = vor.u32 %v60, %v61
    %v63 = vshll.u32 920167782, %v48
    %v64 = vshrl.u32 1326507024, %v49
    %v65 = vor.u32 %v63, %v64
    %vm66 = vcmp.lt.s32.totalorder %v47, 1
    %vm67 = vcmp.lt.s32.totalorder %v47, 2
    %vm68 = vcmp.lt.s32.totalorder %v47, 3
    %vm69 = vcmp.lt.s32.totalorder %v47, 4
    %v70 = vsel %vm66, %v50, %v53
    %v71 = vsel %vm69, %v59, 2102212464
    %v72 = vsel %vm68, %v56, %v71
    %v73 = vsel %vm67, %v70, %v72
    %v74 = vsel %vm66, %v53, %v56
    %v75 = vsel %vm69, %v62, 920167782
    %v76 = vsel %vm68, %v59, %v75
    %v77 = vsel %vm67, %v74, %v76
    %v78 = vsel %vm66, %v56, %v59
    %v79 = vsel %vm69, %v65, 1326507024
    %v80 = vsel %vm68, %v62, %v79
    %v81 = vsel %vm67, %v78, %v80
    %v82 = vshll.u32 %v42, 8
    %v83 = vmul.u32.u64.compose %v82, %v81
    %v84 = vextract.low.u32 %v83
    %v85 = vextract.high.u32 %v83
    %v86 = vmul.u32.u64.compose %v82, %v77
    %v87 = vextract.low.u32 %v86
    %v88 = vextract.high.u32 %v86
    %v89 = vmul.u32 %v82, %v73
    %v90 = vadd.s32 %v85, %v87
    %vm91 = vc.u32 %v85, %v87
    %v92 = vadd.s32 %v88, 1
    %v93 = vsel %vm91, %v92, %v88
    %v94 = vadd.s32 %v89, %v93
    %v95 = vadd.s32 %v94, 536870912
    %v96 = vshrl.u32 %v95, 30
    %v97 = vshll.u32 %v96, 30
    %v98 = vsub.s32 %v94, %v97
    %vm99 = vcmp.lt.s32.totalorder %v98, 0
    %v100 = vsub.s32 0, %v98
    %v101 = vsel %vm99, %v100, %v98
    %v102 = vclz %v101
    %v103 = vsub.s32 %v102, 2
    %vm104 = vcmp.gt.s32.totalorder 0, %v103
    %v105 = vsel %vm104, 0, %v103
    %v106 = vsub.s32 32, %v105
    %v107 = vshll.u32 %v98, %v105
    %v108 = vshrl.u32 %v90, %v106
    %v109 = vor.u32 %v107, %v108
    %v110 = vsub.s32 4294967266, %v105
    %v111 = vadd.s32 %v110, 127
    %v112 = vshll.u32 %v111, 23
    %v113 = vor.u32 4788187, %v112
    %v114 = vand.u32 2147483647, %v113
    %v116 = vcvt.s32.f32 %v109
    %v117 = vmul.f32 %v116, %v114
    %v118 = vxor.u32 %v117, 2147483648
    %v119 = vsel %vm36, %v118, %v117
    %v120 = vsub.s32 4, %v96
    %v121 = vsel %vm36, %v120, %v96
    %v122 = vsel %vm35, %v33, %v119
    %v123 = vsel %vm35, 0, %v121
    %v124 = vcosq.f32.pop %v122
    %v125 = vsinq.f32.pop %v122
    %vm126 = vweird.f32 %v33
    %v127 = vadd.s32 %v123, 3
    %v128 = vand.u32 %v127, 3
    %vm129 = vcmp.lt.s32.totalorder %v128, 2
    %vm130 = vcmp.eq.s32.totalorder %v128, 0
    %v131 = vxor.u32 %v125, 2147483648
    %v132 = vsel %vm130, %v124, %v131
    %vm133 = vcmp.eq.s32.totalorder %v128, 2
    %v134 = vxor.u32 %v124, 2147483648
    %v135 = vsel %vm133, %v134, %v125
    %v136 = vsel %vm129, %v132, %v135
    %v137 = vsel %vm126, nan, %v136
    %138 = vst [vmem:[#allocation5] sm:$0x1] %v137
    %v139 = vand.u32 2147483647, %v33
    %vm140 = vcmp.le.f32.partialorder %v139, 0.7853982
    %vm141 = vcmp.lt.s32.totalorder %v33, 0
    %v142 = vand.u32 %v33, 2139095040
    %v143 = vshrl.u32 %v142, 23
    %v144 = vsub.s32 %v143, 127
    %v145 = vand.u32 2147483647, %v33
    %v146 = vand.u32 %v145, 8388607
    %v147 = vor.u32 %v146, 8388608
    %v148 = vsub.s32 0, %v147
    %v149 = vadd.s32 %v144, 1
    %vm150 = vcmp.gt.s32.totalorder %v149, 0
    %v151 = vsel %vm150, %v149, 0
    %v152 = vshrl.u32 %v151, 5
    %v153 = vand.u32 %v151, 31
    %v154 = vsub.s32 32, %v153
    %v155 = vshrl.u32 683565275, %v154
    %v156 = vshll.u32 683565275, %v153
    %v157 = vshrl.u32 2475754826, %v154
    %v158 = vor.u32 %v156, %v157
    %v159 = vshll.u32 2475754826, %v153
    %v160 = vshrl.u32 2131351028, %v154
    %v161 = vor.u32 %v159, %v160
    %v162 = vshll.u32 2131351028, %v153
    %v163 = vshrl.u32 2102212464, %v154
    %v164 = vor.u32 %v162, %v163
    %v165 = vshll.u32 2102212464, %v153
    %v166 = vshrl.u32 920167782, %v154
    %v167 = vor.u32 %v165, %v166
    %v168 = vshll.u32 920167782, %v153
    %v169 = vshrl.u32 1326507024, %v154
    %v170 = vor.u32 %v168, %v169
    %vm171 = vcmp.lt.s32.totalorder %v152, 1
    %vm172 = vcmp.lt.s32.totalorder %v152, 2
    %vm173 = vcmp.lt.s32.totalorder %v152, 3
    %vm174 = vcmp.lt.s32.totalorder %v152, 4
    %v175 = vsel %vm171, %v155, %v158
    %v176 = vsel %vm174, %v164, 2102212464
    %v177 = vsel %vm173, %v161, %v176
    %v178 = vsel %vm172, %v175, %v177
    %v179 = vsel %vm171, %v158, %v161
    %v180 = vsel %vm174, %v167, 920167782
    %v181 = vsel %vm173, %v164, %v180
    %v182 = vsel %vm172, %v179, %v181
    %v183 = vsel %vm171, %v161, %v164
    %v184 = vsel %vm174, %v170, 1326507024
    %v185 = vsel %vm173, %v167, %v184
    %v186 = vsel %vm172, %v183, %v185
    %v187 = vshll.u32 %v147, 8
    %v188 = vmul.u32.u64.compose %v187, %v186
    %v189 = vextract.low.u32 %v188
    %v190 = vextract.high.u32 %v188
    %v191 = vmul.u32.u64.compose %v187, %v182
    %v192 = vextract.low.u32 %v191
    %v193 = vextract.high.u32 %v191
    %v194 = vmul.u32 %v187, %v178
    %v195 = vadd.s32 %v190, %v192
    %vm196 = vc.u32 %v190, %v192
    %v197 = vadd.s32 %v193, 1
    %v198 = vsel %vm196, %v197, %v193
    %v199 = vadd.s32 %v194, %v198
    %v200 = vadd.s32 %v199, 536870912
    %v201 = vshrl.u32 %v200, 30
    %v202 = vshll.u32 %v201, 30
    %v203 = vsub.s32 %v199, %v202
    %vm204 = vcmp.lt.s32.totalorder %v203, 0
    %v205 = vsub.s32 0, %v203
    %v206 = vsel %vm204, %v205, %v203
    %v207 = vclz %v206
    %v208 = vsub.s32 %v207, 2
    %vm209 = vcmp.gt.s32.totalorder 0, %v208
    %v210 = vsel %vm209, 0, %v208
    %v211 = vsub.s32 32, %v210
    %v212 = vshll.u32 %v203, %v210
    %v213 = vshrl.u32 %v195, %v211
    %v214 = vor.u32 %v212, %v213
    %v215 = vsub.s32 4294967266, %v210
    %v216 = vadd.s32 %v215, 127
    %v217 = vshll.u32 %v216, 23
    %v218 = vor.u32 4788187, %v217
    %v219 = vand.u32 2147483647, %v218
    %v221 = vcvt.s32.f32 %v214
    %v222 = vmul.f32 %v221, %v219
    %v223 = vxor.u32 %v222, 2147483648
    %v224 = vsel %vm141, %v223, %v222
    %v225 = vsub.s32 4, %v201
    %v226 = vsel %vm141, %v225, %v201
    %v227 = vsel %vm140, %v33, %v224
    %v228 = vsel %vm140, 0, %v226
    %v229 = vcosq.f32.pop %v227
    %v230 = vsinq.f32.pop %v227
    %vm231 = vweird.f32 %v33
    %v232 = vand.u32 %v228, 3
    %vm233 = vcmp.lt.s32.totalorder %v232, 2
    %vm234 = vcmp.eq.s32.totalorder %v232, 0
    %v235 = vxor.u32 %v230, 2147483648
    %v236 = vsel %vm234, %v229, %v235
    %vm237 = vcmp.eq.s32.totalorder %v232, 2
    %v238 = vxor.u32 %v229, 2147483648
    %v239 = vsel %vm237, %v238, %v230
    %v240 = vsel %vm233, %v236, %v239
    %v241 = vsel %vm231, nan, %v240
    %242 = vst [vmem:[#allocation6] sm:$0x1] %v241
    // Predicated region
    $region10: #{tpu_custom_call.1} parent=1 // pred_check
      _
    $region11: #{tpu_custom_call.1} parent=1 // pred_check_branch
      %244 = sbr.rel (0) target = $region13
    $region12: #{tpu_custom_call.1} parent=1 // pred_region
      %s246 = ssub.s32 16, 16
      %247 = vsyncadd [#allocation4], %s246
      %s249 = sshll.u32 [#allocation5], 4
      %s250 = int_to_ptr.vmem [resolvable:$true] %s249
      %252 = dma.vmem_to_hbm [thread:$0]  %s250, 16, %s1, [#allocation4]
    $region13: #{tpu_custom_call.1} parent=1 // pred_fallthru
      _
    // Predicated region
    $region14: #{tpu_custom_call.1} parent=1 // pred_check
      _
    $region15: #{tpu_custom_call.1} parent=1 // pred_check_branch
      %254 = sbr.rel (0) target = $region17
    $region16: #{tpu_custom_call.1} parent=1 // pred_region
      %s256 = ssub.s32 16, 16
      %257 = vsyncadd [#allocation7], %s256
      %s259 = sshll.u32 [#allocation6], 4
      %s260 = int_to_ptr.vmem [resolvable:$true] %s259
      %262 = dma.vmem_to_hbm [thread:$0]  %s260, 16, %s2, [#allocation7]
    $region17: #{tpu_custom_call.1} parent=1 // pred_fallthru
      _
    // Predicated region
    $region18: #{tpu_custom_call.1} parent=1 // pred_check
      _
    $region19: #{tpu_custom_call.1} parent=1 // pred_check_branch
      %264 = sbr.rel (0) target = $region21
    $region20: #{tpu_custom_call.1} parent=1 // pred_region
      %265 = dma.done [#allocation4], 16
    $region21: #{tpu_custom_call.1} parent=1 // pred_fallthru
      _
    // Predicated region
    $region22: #{tpu_custom_call.1} parent=1 // pred_check
      _
    $region23: #{tpu_custom_call.1} parent=1 // pred_check_branch
      %267 = sbr.rel (0) target = $region25
    $region24: #{tpu_custom_call.1} parent=1 // pred_region
      %268 = dma.done [#allocation7], 16
    $region25: #{tpu_custom_call.1} parent=1 // pred_fallthru
      _
    %269 = vsyncpa [#allocation3], 1
    %270 = vsyncpa [#allocation4], 1
    %271 = vsyncpa [#allocation7], 1

</llo_original>
